<compile_context>
chip_gen: v5e
topology: v5e:2x2
jax: 0.10.0
libtpu: 0.0.40
codegen_flags: <defaults>
</compile_context>

<pallas_src>
import functools

import jax
import jax.numpy as jnp
from jax.experimental import pallas as pl
from jax.experimental.pallas import tpu as pltpu

_NEG_FILL = -1e30  # class-mask fill: exp(fill - m) == 0, matches f32 m init exactly.


def _round_up(x, m):
    return (x + m - 1) // m * m


def _choose_tile(requested, dim, align):
    """Aligned tile if it is smaller than the dim, else the full dim (allowed)."""
    t = _round_up(max(requested, align), align)
    return dim if t >= dim else t


def _swl_kernel(logits_ref, labels_ref, *rest, tile_b, tile_c, batch, classes,
                has_weights, mask_rows, mask_classes):
    """Online-logsumexp cross entropy with fused label gather.

    grid = (batch_tiles, class_tiles); class axis is the serial reduction.
    scratch (per batch tile, f32): m=running max, l=running exp-sum, g=label logit.
    """
    if has_weights:
        weights_ref, out_ref, m_ref, l_ref, g_ref = rest
    else:
        weights_ref = None
        out_ref, m_ref, l_ref, g_ref = rest

    i = pl.program_id(0)
    j = pl.program_id(1)

    @pl.when(j == 0)
    def _init():
        m_ref[...] = jnp.full_like(m_ref, _NEG_FILL)
        l_ref[...] = jnp.zeros_like(l_ref)
        g_ref[...] = jnp.zeros_like(g_ref)

    # Single read of the logits tile feeds max, exp-sum and label gather.
    x = logits_ref[...].astype(jnp.float32)                      # [TB, TC] f32
    # Tile-local, step-invariant class iota (no + j*tile_c full-tile add).
    class_ids = jax.lax.broadcasted_iota(jnp.int32, x.shape, 1)  # [TB, TC]

    if mask_classes:
        # Lanes with global class id >= C hold undefined edge-block data;
        # neutralize them before the max / exp-sum. For non-last class tiles
        # rel_limit >= tile_c so this is a no-op select.
        rel_limit = classes - j * tile_c
        x = jnp.where(class_ids < rel_limit, x, _NEG_FILL)

    # Tile-relative labels: [TB,1] subtraction instead of a [TB,TC] iota add.
    labels_rel = labels_ref[...] - j * tile_c                    # [TB, 1] int32

    m_old = m_ref[...]                                           # [TB, 1]
    m_new = jnp.maximum(m_old, jnp.max(x, axis=-1, keepdims=True))
    alpha = jnp.exp(m_old - m_new)                               # rescale old sum
    p = jnp.exp(x - m_new)                                       # masked lanes -> 0
    l_ref[...] = alpha * l_ref[...] + jnp.sum(p, axis=-1, keepdims=True)
    m_ref[...] = m_new

    # One-hot label gather (no dynamic gather on TPU). Out-of-range lanes
    # never match a valid label (< C), so no extra masking needed here.
    g_ref[...] += jnp.sum(
        jnp.where(class_ids == labels_rel, x, 0.0), axis=-1, keepdims=True)

    @pl.when(j == pl.num_programs(1) - 1)
    def _finalize():
        lse = m_ref[...] + jnp.log(l_ref[...])                   # [TB, 1]
        per_sample = lse - g_ref[...]                            # CE per sample
        if has_weights:
            per_sample = weights_ref[...] * per_sample
        if mask_rows:
            # Batch-tail rows carry undefined data (possibly NaN/inf) -> force 0
            # AFTER the weight multiply so garbage weights can't leak NaN.
            row_ids = (jax.lax.broadcasted_iota(jnp.int32, per_sample.shape, 0)
                       + i * tile_b)
            per_sample = jnp.where(row_ids < batch, per_sample, 0.0)
        out_ref[...] = per_sample


def sample_weighted_loss(logits, labels, weights=None, *, tile_b=256, tile_c=2048):
    """SampleWeightedLoss forward (base loss = cross entropy, reduction='none').

    logits: [B, C] float32/bfloat16, labels: [B] int, weights: [B] float or None.
    Returns a scalar float32.
    """
    B, C = logits.shape
    has_weights = weights is not None

    # Tile sizes: (8,128)-aligned, or full-dim blocks for small problems.
    tb = _choose_tile(tile_b, B, 8)
    tc = _choose_tile(tile_c, C, 128)
    nb = pl.cdiv(B, tb)
    nc = pl.cdiv(C, tc)
    mask_rows = (B % tb) != 0
    mask_classes = (C % tc) != 0

    # Only the tiny [B] side inputs get reshaped/cast; logits stream unpadded
    # from HBM in their original dtype (bf16 is cast to f32 in-kernel).
    labels2d = labels.astype(jnp.int32).reshape(B, 1)
    in_specs = [
        pl.BlockSpec((tb, tc), lambda i, j: (i, j)),   # logits: streamed over C
        pl.BlockSpec((tb, 1), lambda i, j: (i, 0)),    # labels: per batch tile
    ]
    args = [logits, labels2d]
    if has_weights:
        w2d = weights.astype(jnp.float32).reshape(B, 1)
        in_specs.append(pl.BlockSpec((tb, 1), lambda i, j: (i, 0)))
        args.append(w2d)

    kernel = functools.partial(
        _swl_kernel, tile_b=tb, tile_c=tc, batch=B, classes=C,
        has_weights=has_weights, mask_rows=mask_rows, mask_classes=mask_classes)

    out = pl.pallas_call(
        kernel,
        out_shape=jax.ShapeDtypeStruct((B, 1), jnp.float32),
        grid_spec=pltpu.PrefetchScalarGridSpec(
            num_scalar_prefetch=0,
            grid=(nb, nc),
            in_specs=in_specs,
            out_specs=pl.BlockSpec((tb, 1), lambda i, j: (i, 0)),
            scratch_shapes=[pltpu.VMEM((tb, 1), jnp.float32)] * 3,  # m, l, g
        ),
        compiler_params=pltpu.CompilerParams(
            # Batch tiles independent -> megacore-shardable; class axis is the
            # serial online-LSE reduction (trailing grid axis).
            dimension_semantics=("parallel", "arbitrary"),
            # tb=256, tc=2048 f32 logits tile = 2 MiB; x2 double-buffered = 4 MiB
            # -> fits default scoped VMEM on v5e/v6e/v7x (bf16 inputs are half
            # that). Raise vmem_limit_bytes only if sweeping tc above 4096.
        ),
    )(*args)

    if has_weights:
        # Every output row corresponds to a real sample (no padded rows exist).
        return jnp.sum(out)
    return jnp.sum(out) / B


def _reference(logits, labels, weights):
    # Plain-JAX reference for CrossEntropyLoss(reduction='none') + weighted sum.
    logits = logits.astype(jnp.float32)
    lse = jax.nn.logsumexp(logits, axis=-1)
    label_logit = jnp.take_along_axis(
        logits, labels.astype(jnp.int32)[:, None], axis=-1)[:, 0]
    per_sample = lse - label_logit
    if weights is None:
        return per_sample.mean()
    return (weights.astype(jnp.float32) * per_sample).sum()


if __name__ == "__main__":
    key = jax.random.PRNGKey(0)
    k1, k2, k3, k4, k5, k6 = jax.random.split(key, 6)

    # Case 1: small f32 problem (single full-dim tile), weighted + unweighted.
    B, C = 8, 32
    logits = jax.random.normal(k1, (B, C), dtype=jnp.float32)
    labels = jax.random.randint(k2, (B,), 0, C, dtype=jnp.int32)
    weights = jax.random.uniform(k3, (B,), dtype=jnp.float32)
    weights = weights / weights.sum()

    out_w = sample_weighted_loss(logits, labels, weights)
    jax.block_until_ready(out_w)
    ref_w = _reference(logits, labels, weights)
    assert jnp.allclose(out_w, ref_w, atol=1e-5, rtol=1e-5), (out_w, ref_w)

    out_m = sample_weighted_loss(logits, labels, None)
    jax.block_until_ready(out_m)
    ref_m = _reference(logits, labels, None)
    assert jnp.allclose(out_m, ref_m, atol=1e-5, rtol=1e-5), (out_m, ref_m)

    # Case 2: bf16 logits, 2x2 grid with batch tail (12 % 8) and class tail
    # (200 % 128) handled entirely by in-kernel masking (no logits pad).
    B2, C2 = 12, 200
    logits2 = jax.random.normal(k4, (B2, C2), dtype=jnp.bfloat16)
    labels2 = jax.random.randint(k5, (B2,), 0, C2, dtype=jnp.int32)
    weights2 = jax.random.uniform(k6, (B2,), dtype=jnp.float32)

    out2_w = sample_weighted_loss(logits2, labels2, weights2, tile_b=8, tile_c=128)
    jax.block_until_ready(out2_w)
    ref2_w = _reference(logits2, labels2, weights2)
    assert jnp.allclose(out2_w, ref2_w, atol=2e-2, rtol=2e-2), (out2_w, ref2_w)

    out2_m = sample_weighted_loss(logits2, labels2, None, tile_b=8, tile_c=128)
    jax.block_until_ready(out2_m)
    ref2_m = _reference(logits2, labels2, None)
    assert jnp.allclose(out2_m, ref2_m, atol=2e-2, rtol=2e-2), (out2_m, ref2_m)

    print("KERNEL_OK")
</pallas_src>

<mosaic_0001>
module attributes {stable_mosaic.version = 11 : i64} {
  func.func @_swl_kernel(%arg0: i32, %arg1: i32, %arg2: memref<8x32xf32, #tpu.memory_space<vmem>>, %arg3: memref<8x1xi32, #tpu.memory_space<vmem>>, %arg4: memref<8x1xf32, #tpu.memory_space<vmem>>, %arg5: memref<8x1xf32, #tpu.memory_space<vmem>>, %arg6: memref<8x1xf32, #tpu.memory_space<vmem>>, %arg7: memref<8x1xf32, #tpu.memory_space<vmem>>, %arg8: memref<8x1xf32, #tpu.memory_space<vmem>>) attributes {dimension_semantics = [#tpu.dimension_semantics<parallel>, #tpu.dimension_semantics<arbitrary>], iteration_bounds = array<i64: 1, 1>, scalar_prefetch = 0 : i64, scratch_operands = 3 : i64, tpu.core_type = #tpu.core_type<tc>, window_params = [{transform_indices = @transform_0, window_bounds = array<i64: 8, 32>}, {transform_indices = @transform_1, window_bounds = array<i64: 8, 1>}, {transform_indices = @transform_2, window_bounds = array<i64: 8, 1>}, {transform_indices = @transform_3, window_bounds = array<i64: 8, 1>}]} {
    %c0_i32 = arith.constant 0 : i32
    %0 = arith.cmpi eq, %arg1, %c0_i32 : i32
    %1 = arith.extui %0 : i1 to i32
    %c0_i32_0 = arith.constant 0 : i32
    %2 = arith.cmpi ne, %1, %c0_i32_0 : i32
    scf.if %2 {
      %cst_21 = arith.constant -1.000000e+30 : f32
      %37 = vector.broadcast %cst_21 : f32 to vector<8x1xf32>
      %c0_22 = arith.constant 0 : index
      %c0_23 = arith.constant 0 : index
      %38 = vector.load %arg6[%c0_22, %c0_23] : memref<8x1xf32, #tpu.memory_space<vmem>>, vector<8x1xf32>
      tpu.vector_store %arg6[%c0_22, %c0_23], %37 {strides = array<i32>} : memref<8x1xf32, #tpu.memory_space<vmem>>, vector<8x1xf32>,
      %cst_24 = arith.constant 0.000000e+00 : f32
      %39 = vector.broadcast %cst_24 : f32 to vector<8x1xf32>
      %c0_25 = arith.constant 0 : index
      %c0_26 = arith.constant 0 : index
      %40 = vector.load %arg7[%c0_25, %c0_26] : memref<8x1xf32, #tpu.memory_space<vmem>>, vector<8x1xf32>
      tpu.vector_store %arg7[%c0_25, %c0_26], %39 {strides = array<i32>} : memref<8x1xf32, #tpu.memory_space<vmem>>, vector<8x1xf32>,
      %cst_27 = arith.constant 0.000000e+00 : f32
      %41 = vector.broadcast %cst_27 : f32 to vector<8x1xf32>
      %c0_28 = arith.constant 0 : index
      %c0_29 = arith.constant 0 : index
      %42 = vector.load %arg8[%c0_28, %c0_29] : memref<8x1xf32, #tpu.memory_space<vmem>>, vector<8x1xf32>
      tpu.vector_store %arg8[%c0_28, %c0_29], %41 {strides = array<i32>} : memref<8x1xf32, #tpu.memory_space<vmem>>, vector<8x1xf32>,
    } else {
    }
    %c0 = arith.constant 0 : index
    %c0_1 = arith.constant 0 : index
    %3 = vector.load %arg2[%c0, %c0_1] : memref<8x32xf32, #tpu.memory_space<vmem>>, vector<8x32xf32>
    %4 = tpu.iota {dimensions = array<i32: 1>} : vector<8x32xi32>
    %c0_2 = arith.constant 0 : index
    %c0_3 = arith.constant 0 : index
    %5 = vector.load %arg3[%c0_2, %c0_3] : memref<8x1xi32, #tpu.memory_space<vmem>>, vector<8x1xi32>
    %c32_i32 = arith.constant 32 : i32
    %6 = arith.muli %arg1, %c32_i32 : i32
    %7 = vector.broadcast %6 : i32 to vector<8x1xi32>
    %8 = arith.subi %5, %7 : vector<8x1xi32>
    %c0_4 = arith.constant 0 : index
    %c0_5 = arith.constant 0 : index
    %9 = vector.load %arg6[%c0_4, %c0_5] : memref<8x1xf32, #tpu.memory_space<vmem>>, vector<8x1xf32>
    %cst = arith.constant dense<0xFF800000> : vector<8xf32>
    %10 = vector.multi_reduction <maximumf>, %3, %cst [1] : vector<8x32xf32> to vector<8xf32>
    %11 = vector.shape_cast %10 : vector<8xf32> to vector<8x1xf32>
    %12 = arith.maximumf %9, %11 : vector<8x1xf32>
    %13 = arith.subf %9, %12 : vector<8x1xf32>
    %14 = math.exp %13 : vector<8x1xf32>
    %15 = vector.broadcast %12 : vector<8x1xf32> to vector<8x32xf32>
    %16 = arith.subf %3, %15 : vector<8x32xf32>
    %17 = math.exp %16 : vector<8x32xf32>
    %c0_6 = arith.constant 0 : index
    %c0_7 = arith.constant 0 : index
    %18 = vector.load %arg7[%c0_6, %c0_7] : memref<8x1xf32, #tpu.memory_space<vmem>>, vector<8x1xf32>
    %19 = arith.mulf %14, %18 : vector<8x1xf32>
    %cst_8 = arith.constant dense<0.000000e+00> : vector<8xf32>
    %20 = vector.multi_reduction <add>, %17, %cst_8 [1] : vector<8x32xf32> to vector<8xf32>
    %21 = vector.shape_cast %20 : vector<8xf32> to vector<8x1xf32>
    %22 = arith.addf %19, %21 : vector<8x1xf32>
    %c0_9 = arith.constant 0 : index
    %c0_10 = arith.constant 0 : index
    %23 = vector.load %arg7[%c0_9, %c0_10] : memref<8x1xf32, #tpu.memory_space<vmem>>, vector<8x1xf32>
    tpu.vector_store %arg7[%c0_9, %c0_10], %22 {strides = array<i32>} : memref<8x1xf32, #tpu.memory_space<vmem>>, vector<8x1xf32>,
    %c0_11 = arith.constant 0 : index
    %c0_12 = arith.constant 0 : index
    %24 = vector.load %arg6[%c0_11, %c0_12] : memref<8x1xf32, #tpu.memory_space<vmem>>, vector<8x1xf32>
    tpu.vector_store %arg6[%c0_11, %c0_12], %12 {strides = array<i32>} : memref<8x1xf32, #tpu.memory_space<vmem>>, vector<8x1xf32>,
    %c0_13 = arith.constant 0 : index
    %c0_14 = arith.constant 0 : index
    %25 = vector.load %arg8[%c0_13, %c0_14] : memref<8x1xf32, #tpu.memory_space<vmem>>, vector<8x1xf32>
    %26 = vector.broadcast %8 : vector<8x1xi32> to vector<8x32xi32>
    %27 = arith.cmpi eq, %4, %26 : vector<8x32xi32>
    %cst_15 = arith.constant 0.000000e+00 : f32
    %28 = vector.broadcast %cst_15 : f32 to vector<8x32xf32>
    %29 = arith.select %27, %3, %28 : vector<8x32xi1>, vector<8x32xf32>
    %cst_16 = arith.constant dense<0.000000e+00> : vector<8xf32>
    %30 = vector.multi_reduction <add>, %29, %cst_16 [1] : vector<8x32xf32> to vector<8xf32>
    %31 = vector.shape_cast %30 : vector<8xf32> to vector<8x1xf32>
    %32 = arith.addf %25, %31 : vector<8x1xf32>
    %c0_17 = arith.constant 0 : index
    %c0_18 = arith.constant 0 : index
    %33 = vector.load %arg8[%c0_17, %c0_18] : memref<8x1xf32, #tpu.memory_space<vmem>>, vector<8x1xf32>
    tpu.vector_store %arg8[%c0_17, %c0_18], %32 {strides = array<i32>} : memref<8x1xf32, #tpu.memory_space<vmem>>, vector<8x1xf32>,
    %c0_i32_19 = arith.constant 0 : i32
    %34 = arith.cmpi eq, %arg1, %c0_i32_19 : i32
    %35 = arith.extui %34 : i1 to i32
    %c0_i32_20 = arith.constant 0 : i32
    %36 = arith.cmpi ne, %35, %c0_i32_20 : i32
    scf.if %36 {
      %c0_21 = arith.constant 0 : index
      %c0_22 = arith.constant 0 : index
      %37 = vector.load %arg6[%c0_21, %c0_22] : memref<8x1xf32, #tpu.memory_space<vmem>>, vector<8x1xf32>
      %c0_23 = arith.constant 0 : index
      %c0_24 = arith.constant 0 : index
      %38 = vector.load %arg7[%c0_23, %c0_24] : memref<8x1xf32, #tpu.memory_space<vmem>>, vector<8x1xf32>
      %39 = math.log %38 : vector<8x1xf32>
      %40 = arith.addf %37, %39 : vector<8x1xf32>
      %c0_25 = arith.constant 0 : index
      %c0_26 = arith.constant 0 : index
      %41 = vector.load %arg8[%c0_25, %c0_26] : memref<8x1xf32, #tpu.memory_space<vmem>>, vector<8x1xf32>
      %42 = arith.subf %40, %41 : vector<8x1xf32>
      %c0_27 = arith.constant 0 : index
      %c0_28 = arith.constant 0 : index
      %43 = vector.load %arg4[%c0_27, %c0_28] : memref<8x1xf32, #tpu.memory_space<vmem>>, vector<8x1xf32>
      %44 = arith.mulf %43, %42 : vector<8x1xf32>
      %c0_29 = arith.constant 0 : index
      %c0_30 = arith.constant 0 : index
      %45 = vector.load %arg5[%c0_29, %c0_30] : memref<8x1xf32, #tpu.memory_space<vmem>>, vector<8x1xf32>
      tpu.vector_store %arg5[%c0_29, %c0_30], %44 {strides = array<i32>} : memref<8x1xf32, #tpu.memory_space<vmem>>, vector<8x1xf32>,
    } else {
    }
    return
  }
  func.func @transform_0(%arg0: i32, %arg1: i32) -> (i32, i32) {
    %c0_i32 = arith.constant 0 : i32
    return %arg0, %arg1 : i32, i32
  }
  func.func @transform_1(%arg0: i32, %arg1: i32) -> (i32, i32) {
    %c0_i32 = arith.constant 0 : i32
    %c0_i32_0 = arith.constant 0 : i32
    return %arg0, %c0_i32 : i32, i32
  }
  func.func @transform_2(%arg0: i32, %arg1: i32) -> (i32, i32) {
    %c0_i32 = arith.constant 0 : i32
    %c0_i32_0 = arith.constant 0 : i32
    return %arg0, %c0_i32 : i32, i32
  }
  func.func @transform_3(%arg0: i32, %arg1: i32) -> (i32, i32) {
    %c0_i32 = arith.constant 0 : i32
    %c0_i32_0 = arith.constant 0 : i32
    return %arg0, %c0_i32 : i32, i32
  }
}

</mosaic_0001>

<llo_original>
// kernel: tpu_custom_call.1
$region0: #{tpu_custom_call.1}
  #allocation0 [shape = 'u32[]', space=smem, size = 0x4, offset = 0x4, fixed_abs, tag = 'smem constant byte address 0x4 - core index']
  #allocation1 [shape = 'u32[72,128]{1,0:T(1,128)}', space=vmem, size = 0x9000, scoped, tag = 'internal scratch']
  #allocation2 [shape = 'f32[8,1]{1,0:T(8,128)}', space=vmem, size = 0x1000, scoped, tag = 'scratch operand']
  #allocation3 [shape = 'f32[8,1]{1,0:T(8,128)}', space=vmem, size = 0x1000, scoped, tag = 'scratch operand']
  #allocation4 [shape = 'f32[8,1]{1,0:T(8,128)}', space=vmem, size = 0x1000, scoped, tag = 'scratch operand']
  %s0 = inlined_call_operand.vmem [shape: f32[8,32], index: 0, kind: input, shape index: {}]
  %s1 = inlined_call_operand.vmem [shape: s32[8,1], index: 1, kind: input, shape index: {}]
  %s2 = inlined_call_operand.vmem [shape: f32[8,1], index: 2, kind: input, shape index: {}]
  %s3 = inlined_call_operand.vmem [shape: f32[8,1], index: 3, kind: output, shape index: {}]
  %s4 = sld [smem:[#allocation0]]
  $region30: #{tpu_custom_call.1} parent=0
    _
  %s6 = ssub.s32 1, %s4
  %s7 = scalar_select 0, %s6, %s4
  // Predicated region
  $region2: #{tpu_custom_call.1} parent=0 // pred_check
    _
  $region3: #{tpu_custom_call.1} parent=0 // pred_check_branch
    %9 = sbr.rel (0) target = $region5
  $region4: #{tpu_custom_call.1} parent=0 // pred_region
    _
  $region5: #{tpu_custom_call.1} parent=0 // pred_fallthru
    _
  // Predicated region
  $region6: #{tpu_custom_call.1} parent=0 // pred_check
    _
  $region7: #{tpu_custom_call.1} parent=0 // pred_check_branch
    %11 = sbr.rel (0) target = $region9
  $region8: #{tpu_custom_call.1} parent=0 // pred_region
    _
  $region9: #{tpu_custom_call.1} parent=0 // pred_fallthru
    _
  // Predicated region
  $region10: #{tpu_custom_call.1} parent=0 // pred_check
    _
  $region11: #{tpu_custom_call.1} parent=0 // pred_check_branch
    %13 = sbr.rel (0) target = $region13
  $region12: #{tpu_custom_call.1} parent=0 // pred_region
    _
  $region13: #{tpu_custom_call.1} parent=0 // pred_fallthru
    _
  %p14 = scmp.eq.s32.totalorder 0, 0
  // Predicated region
  $region14: #{tpu_custom_call.1} parent=0 // pred_check
    %p15 = pneg %p14
  $region15: #{tpu_custom_call.1} parent=0 // pred_check_branch
    %17 = sbr.rel (%p15) target = $region17
  $region16: #{tpu_custom_call.1} parent=0 // pred_region
    %vm18 = vcmask 7168
    %19 = vst.msk [vmem:[#allocation2] sm:$0xff] %vm18, -1e+30
    %20 = vst.msk [vmem:[#allocation3] sm:$0xff] %vm18, 0.0
    %21 = vst.msk [vmem:[#allocation4] sm:$0xff] %vm18, 0.0
  $region17: #{tpu_custom_call.1} parent=0 // pred_fallthru
    _
  %v22 = vld [vmem:[%s0] sm:$0xff]
  %v23 = vlaneseq
  %v24 = vand.u32 %v23, 127
  %v25 = vld [vmem:[%s1] sm:$0xff]
  %s26 = smul.u32 0, 32
  %v27 = vstv %s26
  %v28 = vsub.s32 %v25, %v27
  %v29 = vld [vmem:[#allocation2] sm:$0xff]
  %vm30 = vcmask 261120
  %v31 = vsel %vm30, %v22, -inf
  %32 = vmax.xlane.f32.xlu0 %v31
  %v33 = vpop.xlane.xlu0 %32
  %v34 = vmax.f32 %v29, %v33
  %v35 = vsub.f32 %v29, %v34
  %v36 = vmul.f32 %v35, 1.442695
  %v37 = vpow.pop %v36
  %39 = vset.pattern.permute.xlu0 0
  %40 = vperm.xlu0 %39, %v34
  %v41 = vpop.permute.xlu0 %40
  %v43 = vsub.f32 %v22, %v41
  %v44 = vmul.f32 %v43, 1.442695
  %v45 = vpow.pop %v44
  %v46 = vld [vmem:[#allocation3] sm:$0xff]
  %v47 = vmul.f32 %v37, %v46
  %v48 = vsel %vm30, %v45, 0.0
  %49 = vadd.xlane.f32.xlu0 %v48
  %v50 = vpop.xlane.xlu0 %49
  %v51 = vadd.f32 %v47, %v50
  %vm52 = vcmask 7168
  %53 = vst.msk [vmem:[#allocation3] sm:$0xff] %vm52, %v51
  %54 = vst.msk [vmem:[#allocation2] sm:$0xff] %vm52, %v34
  %v55 = vld [vmem:[#allocation4] sm:$0xff]
  %56 = vset.pattern.permute.xlu0 0
  %57 = vperm.xlu0 %56, %v28
  %v58 = vpop.permute.xlu0 %57
  %vm59 = vcmp.eq.s32.totalorder %v24, %v58
  %v60 = vsel %vm59, %v22, 0.0
  %v61 = vsel %vm30, %v60, 0.0
  %62 = vadd.xlane.f32.xlu0 %v61
  %v63 = vpop.xlane.xlu0 %62
  %v64 = vadd.f32 %v55, %v63
  %65 = vst.msk [vmem:[#allocation4] sm:$0xff] %vm52, %v64
  // Predicated region
  $region18: #{tpu_custom_call.1} parent=0 // pred_check
    %p66 = pneg %p14
  $region19: #{tpu_custom_call.1} parent=0 // pred_check_branch
    %68 = sbr.rel (%p66) target = $region21
  $region20: #{tpu_custom_call.1} parent=0 // pred_region
    %v69 = vld [vmem:[#allocation2] sm:$0xff]
    %v70 = vld [vmem:[#allocation3] sm:$0xff]
    %v71 = vlog2.pop %v70
    %v72 = vmul.f32 %v71, 0.6931472
    %v73 = vadd.f32 %v69, %v72
    %v74 = vld [vmem:[#allocation4] sm:$0xff]
    %v75 = vsub.f32 %v73, %v74
    %v76 = vld [vmem:[%s2] sm:$0xff]
    %v77 = vmul.f32 %v76, %v75
    %78 = vst.msk [vmem:[%s3] sm:$0xff] %vm52, %v77
  $region21: #{tpu_custom_call.1} parent=0 // pred_fallthru
    _
  // Predicated region
  $region22: #{tpu_custom_call.1} parent=0 // pred_check
    _
  $region23: #{tpu_custom_call.1} parent=0 // pred_check_branch
    %80 = sbr.rel (0) target = $region25
  $region24: #{tpu_custom_call.1} parent=0 // pred_region
    _
  $region25: #{tpu_custom_call.1} parent=0 // pred_fallthru
    _
  // Predicated region
  $region26: #{tpu_custom_call.1} parent=0 // pred_check
    _
  $region27: #{tpu_custom_call.1} parent=0 // pred_check_branch
    %82 = sbr.rel (0) target = $region29
  $region28: #{tpu_custom_call.1} parent=0 // pred_region
    _
  $region29: #{tpu_custom_call.1} parent=0 // pred_fallthru
    _

</llo_original>
